<compile_context>
chip_gen: v6e
topology: v6e:2x2x1
jax: 0.10.0
libtpu: 0.0.40
codegen_flags: <defaults>
</compile_context>

<pallas_src>
import functools

import jax
import jax.numpy as jnp
from jax.experimental import pallas as pl
from jax.experimental.pallas import tpu as pltpu


# ----------------------------- Pallas kernel ------------------------------ #
def _linear_3dmm_kernel(x_ref, sig_ref, w_ref, mu_ref, o_ref):
    # tex_para = norm_tex_para * sig_tex  (tiny B x K elementwise, f32).
    tex_para = x_ref[...] * sig_ref[...]
    # Weight tile streamed from HBM in its stored dtype (bf16 by default),
    # upcast in VMEM so only the weight stream is quantized; f32 accumulation.
    w = w_ref[...].astype(jnp.float32)
    y = jnp.dot(tex_para, w, preferred_element_type=jnp.float32)
    o_ref[...] = (y + mu_ref[...]).astype(o_ref.dtype)


# --------------------- one-time (model-init) parameter pack ---------------- #
def prepare_linear_3dmm_params(sig_tex, b_tex, mu_tex, *, num_tiles=4,
                               weight_dtype=jnp.bfloat16):
    """Pack the 3DMM texture buffers once at model init.

    - Casts b_tex to the streamed dtype (bf16 by default) ONCE, not per call.
    - Pads N up to a multiple of 128*num_tiles so every output tile is
      lane-dense (unmasked stores) and the grid divides evenly.
    """
    K, N = b_tex.shape
    assert N % 3 == 0
    tile_quant = 128 * num_tiles
    n_pad_total = (-N) % tile_quant

    w = jnp.asarray(b_tex, dtype=weight_dtype)
    mu = jnp.asarray(mu_tex, dtype=jnp.float32).reshape(1, N)
    if n_pad_total:
        w = jnp.pad(w, ((0, 0), (0, n_pad_total)))
        mu = jnp.pad(mu, ((0, 0), (0, n_pad_total)))
    sig = jnp.asarray(sig_tex, dtype=jnp.float32).reshape(1, K)

    return {"sig": sig, "w": w, "mu": mu, "N": int(N), "num_tiles": int(num_tiles)}


# ------------------------------ jitted forward ----------------------------- #
@functools.partial(jax.jit, static_argnames=("n_valid", "num_tiles"))
def _linear_3dmm_pallas(x, sig, w, mu, *, n_valid, num_tiles):
    B, K = x.shape
    Kw, N_pad = w.shape
    assert K == Kw
    assert N_pad % (128 * num_tiles) == 0
    tn = N_pad // num_tiles

    out = pl.pallas_call(
        _linear_3dmm_kernel,
        out_shape=jax.ShapeDtypeStruct((B, N_pad), jnp.float32),
        grid_spec=pltpu.PrefetchScalarGridSpec(
            num_scalar_prefetch=0,
            grid=(num_tiles,),
            in_specs=[
                pl.BlockSpec((B, K), lambda j: (0, 0)),    # x   (VMEM-resident)
                pl.BlockSpec((1, K), lambda j: (0, 0)),    # sig (VMEM-resident)
                pl.BlockSpec((K, tn), lambda j: (0, j)),   # b_tex tile along N
                pl.BlockSpec((1, tn), lambda j: (0, j)),   # mu_tex tile along N
            ],
            out_specs=pl.BlockSpec((B, tn), lambda j: (0, j)),
        ),
        compiler_params=pltpu.CompilerParams(
            # Disjoint output tiles, no accumulator -> v7x megacore can split
            # the small even grid across both TensorCores.
            dimension_semantics=("parallel",),
        ),
    )(x, sig, w, mu)

    point_num = n_valid // 3
    return out[:, :n_valid].reshape(B, point_num, 3)


def linear_3dmm_forward(norm_tex_para, params):
    x = jnp.asarray(norm_tex_para, dtype=jnp.float32)
    return _linear_3dmm_pallas(x, params["sig"], params["w"], params["mu"],
                               n_valid=params["N"], num_tiles=params["num_tiles"])


# ------------------------ pure-JAX module reference ------------------------ #
def reference_forward(norm_tex_para, sig_tex, b_tex, mu_tex):
    tex_para = norm_tex_para * sig_tex.reshape(1, -1)
    texture = jnp.dot(tex_para, b_tex, precision=jax.lax.Precision.HIGHEST)
    texture = texture + mu_tex.reshape(1, -1)
    return texture.reshape(norm_tex_para.shape[0], -1, 3)


if __name__ == "__main__":
    # Small shapes consistent with the module's forward. point_num chosen so
    # N = 3*point_num is NOT a multiple of 128, exercising the same padded /
    # ragged-N path the real model (point_num=34650, N=103950) needs.
    B, TEX_DIMS, POINT_NUM = 2, 16, 1050
    N = 3 * POINT_NUM

    key = jax.random.PRNGKey(0)
    k1, k2, k3, k4 = jax.random.split(key, 4)
    norm_tex_para = jax.random.normal(k1, (B, TEX_DIMS), jnp.float32)
    sig_tex = jnp.abs(jax.random.normal(k2, (TEX_DIMS,), jnp.float32)) + 0.1
    b_tex = jax.random.normal(k3, (TEX_DIMS, N), jnp.float32) * 0.05
    mu_tex = jax.random.normal(k4, (N,), jnp.float32) * 0.1

    # --- Default path: one-time init pack with bf16 weight stream. ---
    params = prepare_linear_3dmm_params(sig_tex, b_tex, mu_tex, num_tiles=4)
    texture = jax.block_until_ready(linear_3dmm_forward(norm_tex_para, params))
    assert texture.shape == (B, POINT_NUM, 3)

    # Apples-to-apples: same bf16-rounded weights, f32 activation (tight tol).
    xs = norm_tex_para * sig_tex.reshape(1, -1)
    w_b = b_tex.astype(jnp.bfloat16).astype(jnp.float32)
    ref_bf16 = (jnp.dot(xs, w_b, precision=jax.lax.Precision.HIGHEST)
                + mu_tex.reshape(1, -1)).reshape(B, POINT_NUM, 3)
    assert jnp.allclose(texture, ref_bf16, rtol=2e-3, atol=2e-3)

    # Module-semantics f32 reference (loose tol accounts for bf16 weight stream).
    ref_f32 = reference_forward(norm_tex_para, sig_tex, b_tex, mu_tex)
    assert jnp.allclose(texture, ref_f32, rtol=2e-2, atol=2e-2)

    # Exact-dtype path (f32 weight stream) against the f32 module reference.
    params_f32 = prepare_linear_3dmm_params(sig_tex, b_tex, mu_tex,
                                            num_tiles=4,
                                            weight_dtype=jnp.float32)
    texture_f32 = jax.block_until_ready(
        linear_3dmm_forward(norm_tex_para, params_f32))
    assert texture_f32.shape == (B, POINT_NUM, 3)
    assert jnp.allclose(texture_f32, ref_f32, rtol=2e-3, atol=2e-3)

    print("KERNEL_OK")
</pallas_src>

<mosaic_0001>
module attributes {stable_mosaic.version = 11 : i64} {
  func.func @_linear_3dmm_kernel(%arg0: i32, %arg1: memref<2x16xf32, #tpu.memory_space<vmem>>, %arg2: memref<1x16xf32, #tpu.memory_space<vmem>>, %arg3: memref<16x896xbf16, #tpu.memory_space<vmem>>, %arg4: memref<1x896xf32, #tpu.memory_space<vmem>>, %arg5: memref<2x896xf32, #tpu.memory_space<vmem>>) attributes {dimension_semantics = [#tpu.dimension_semantics<parallel>], iteration_bounds = array<i64: 4>, scalar_prefetch = 0 : i64, scratch_operands = 0 : i64, tpu.core_type = #tpu.core_type<tc>, window_params = [{pipeline_mode = #tpu.pipeline_mode<synchronous>, transform_indices = @transform_0, window_bounds = array<i64: 2, 16>}, {pipeline_mode = #tpu.pipeline_mode<synchronous>, transform_indices = @transform_1, window_bounds = array<i64: 1, 16>}, {transform_indices = @transform_2, window_bounds = array<i64: 16, 896>}, {transform_indices = @transform_3, window_bounds = array<i64: 1, 896>}, {transform_indices = @transform_4, window_bounds = array<i64: 2, 896>}]} {
    %c0 = arith.constant 0 : index
    %c0_0 = arith.constant 0 : index
    %0 = vector.load %arg1[%c0, %c0_0] : memref<2x16xf32, #tpu.memory_space<vmem>>, vector<2x16xf32>
    %c0_1 = arith.constant 0 : index
    %c0_2 = arith.constant 0 : index
    %1 = vector.load %arg2[%c0_1, %c0_2] : memref<1x16xf32, #tpu.memory_space<vmem>>, vector<1x16xf32>
    %2 = vector.broadcast %1 : vector<1x16xf32> to vector<2x16xf32>
    %3 = arith.mulf %0, %2 : vector<2x16xf32>
    %c0_3 = arith.constant 0 : index
    %c0_4 = arith.constant 0 : index
    %4 = vector.load %arg3[%c0_3, %c0_4] : memref<16x896xbf16, #tpu.memory_space<vmem>>, vector<16x896xbf16>
    %5 = arith.extf %4 : vector<16x896xbf16> to vector<16x896xf32>
    %cst = arith.constant dense<0.000000e+00> : vector<2x896xf32>
    %6 = tpu.matmul %3, %5, %cst {dimension_numbers = #tpu.dot_dimension_numbers<[1], [0], [0], [1], [0, 0, 1, 1], [], []>} : vector<2x16xf32>, vector<16x896xf32>, vector<2x896xf32> -> vector<2x896xf32>
    %c0_5 = arith.constant 0 : index
    %c0_6 = arith.constant 0 : index
    %7 = vector.load %arg4[%c0_5, %c0_6] : memref<1x896xf32, #tpu.memory_space<vmem>>, vector<1x896xf32>
    %8 = vector.broadcast %7 : vector<1x896xf32> to vector<2x896xf32>
    %9 = arith.addf %6, %8 : vector<2x896xf32>
    %c0_7 = arith.constant 0 : index
    %c0_8 = arith.constant 0 : index
    %10 = vector.load %arg5[%c0_7, %c0_8] : memref<2x896xf32, #tpu.memory_space<vmem>>, vector<2x896xf32>
    tpu.vector_store %arg5[%c0_7, %c0_8], %9 {strides = array<i32>} : memref<2x896xf32, #tpu.memory_space<vmem>>, vector<2x896xf32>,
    return
  }
  func.func @transform_0(%arg0: i32) -> (i32, i32) {
    %c0_i32 = arith.constant 0 : i32
    %c0_i32_0 = arith.constant 0 : i32
    %c0_i32_1 = arith.constant 0 : i32
    return %c0_i32, %c0_i32_0 : i32, i32
  }
  func.func @transform_1(%arg0: i32) -> (i32, i32) {
    %c0_i32 = arith.constant 0 : i32
    %c0_i32_0 = arith.constant 0 : i32
    %c0_i32_1 = arith.constant 0 : i32
    return %c0_i32, %c0_i32_0 : i32, i32
  }
  func.func @transform_2(%arg0: i32) -> (i32, i32) {
    %c0_i32 = arith.constant 0 : i32
    %c0_i32_0 = arith.constant 0 : i32
    return %c0_i32, %arg0 : i32, i32
  }
  func.func @transform_3(%arg0: i32) -> (i32, i32) {
    %c0_i32 = arith.constant 0 : i32
    %c0_i32_0 = arith.constant 0 : i32
    return %c0_i32, %arg0 : i32, i32
  }
  func.func @transform_4(%arg0: i32) -> (i32, i32) {
    %c0_i32 = arith.constant 0 : i32
    %c0_i32_0 = arith.constant 0 : i32
    return %c0_i32, %arg0 : i32, i32
  }
}

</mosaic_0001>

<llo_original>
// kernel: _linear_3dmm_pallas.1
$region0: #{_linear_3dmm_pallas.1}
  #allocation0 [shape = 'u32[]', space=smem, size = 0x4, offset = 0x4, fixed_abs, tag = 'smem constant byte address 0x4 - core index']
  #allocation1 [shape = 'u32[144,128]{1,0:T(1,128)}', space=vmem, size = 0x12000, scoped, tag = 'internal scratch']
  %s0 = inlined_call_operand.hbm [shape: f32[2,16], index: 0, kind: input, shape index: {}]
  %s1 = inlined_call_operand.hbm [shape: f32[1,16], index: 1, kind: input, shape index: {}]
  %s2 = inlined_call_operand.hbm [shape: bf16[16,3584], index: 2, kind: input, shape index: {}]
  %s3 = inlined_call_operand.hbm [shape: f32[1,3584], index: 3, kind: input, shape index: {}]
  %s4 = inlined_call_operand.vmem [shape: f32[2,3584], index: 4, kind: output, shape index: {}]
  %s5 = sld [smem:[#allocation0]]
  $region65: #{_linear_3dmm_pallas.1} parent=0
    _
  %s7 = ssub.s32 1, %s5
  %s8 = scalar_select 0, %s7, %s5
  $region1: #{_linear_3dmm_pallas.1} parent=0
    #allocation2 [shape = 'u8[1024]{0}', space=vmem, size = 0x400, scoped, tag = 'input window, operand 0, single buffered']
    #allocation3 [shape = 's32[2]{0}', space=sflag, size = 0x8, scoped, tag = 'scoped memory for _linear_3dmm_pallas.1']
    #allocation4 [shape = 'u8[512]{0}', space=vmem, size = 0x400, scoped, tag = 'input window, operand 1, single buffered']
    #allocation5 [shape = 's32[1]{0}', space=sflag, size = 0x4, scoped, tag = 'scoped memory for _linear_3dmm_pallas.1']
    #allocation6 [shape = 'u8[57344]{0}', space=vmem, size = 0xe000, scoped, tag = 'input window, operand 2']
    #allocation7 [shape = 'u8[7168]{0}', space=vmem, size = 0x1c00, scoped, tag = 'input window, operand 3']
    %9 = vsyncpa [#allocation3], 0
    %10 = vsyncpa [#allocation5], 0
    loop: start=0, step=1, limit=6
    $region2: #{_linear_3dmm_pallas.1} parent=1 // loop_pre_header
      _
    $region3: #{_linear_3dmm_pallas.1} parent=1 // loop_header
      %s12 = sphi 0, %s16
      %p13 = scmp.ge.s32.totalorder %s12, 6
      %s20 = sphi 0, %s20
      %s22 = sphi 0, %s20
      %s23 = sphi 0, %s22
      %s37 = sphi 0, %s23
      %s41 = sphi 0, %s41
      %s43 = sphi 0, %s41
      %s44 = sphi 0, %s43
      %s58 = sphi 0, %s44
      %s64 = sphi 0, %s66
      %s67 = sphi 0, %s64
      %s68 = sphi 0, %s67
      %s84 = sphi 0, %s68
      %s90 = sphi 0, %s92
      %s93 = sphi 0, %s90
      %s94 = sphi 0, %s93
      %s110 = sphi 0, %s94
      %s116 = sphi 0, %s118
      %s119 = sphi 0, %s116
      %s120 = sphi 0, %s119
      %s136 = sphi 0, %s120
    $region4: #{_linear_3dmm_pallas.1} parent=1 // loop_header_branch
      %15 = sbr.rel (%p13) target = $region8
    $region5: #{_linear_3dmm_pallas.1} parent=1 // loop_body
      %s17 = ssub.s32 %s12, 1
      %s18 = ssub.s32 %s12, 2
      %s19 = sadd.s32 %s12, 1
      %s21 = sadd.s32 %s20, 1
      %p24 = scmp.eq.s32.totalorder %s12, 3
      %p25 = scmp.ne.s32.totalorder %s20, %s22
      %p26 = scmp.eq.s32.totalorder %s12, 0
      %p27 = por %p25, %p26
      %p28 = scmp.ne.s32.totalorder %s20, %s22
      %p29 = scmp.eq.s32.totalorder %s17, 3
      %p30 = por %p28, %p29
      %p31 = scmp.ne.s32.totalorder %s22, %s23
      %p32 = scmp.eq.s32.totalorder %s17, 0
      %p33 = por %p31, %p32
      %p34 = scmp.ne.s32.totalorder %s22, %s23
      %p35 = scmp.eq.s32.totalorder %s18, 3
      %p36 = por %p34, %p35
      %p38 = scmp.ne.s32.totalorder %s23, %s37
      %p39 = scmp.eq.s32.totalorder %s18, 0
      %p40 = por %p38, %p39
      %s42 = sadd.s32 %s41, 1
      %p45 = scmp.eq.s32.totalorder %s12, 3
      %p46 = scmp.ne.s32.totalorder %s41, %s43
      %p47 = scmp.eq.s32.totalorder %s12, 0
      %p48 = por %p46, %p47
      %p49 = scmp.ne.s32.totalorder %s41, %s43
      %p50 = scmp.eq.s32.totalorder %s17, 3
      %p51 = por %p49, %p50
      %p52 = scmp.ne.s32.totalorder %s43, %s44
      %p53 = scmp.eq.s32.totalorder %s17, 0
      %p54 = por %p52, %p53
      %p55 = scmp.ne.s32.totalorder %s43, %s44
      %p56 = scmp.eq.s32.totalorder %s18, 3
      %p57 = por %p55, %p56
      %p59 = scmp.ne.s32.totalorder %s44, %s58
      %p60 = scmp.eq.s32.totalorder %s18, 0
      %p61 = por %p59, %p60
      %s62 = ssub.s32 %s12, %s19
      %p63 = scmp.eq.s32.totalorder %s62, 0
      %s65 = sadd.s32 %s64, 1
      %s66 = scalar_select %p63, %s64, %s65
      %p69 = pneg %p63
      %p70 = scmp.eq.s32.totalorder %s12, 3
      %p71 = por %p69, %p70
      %p72 = scmp.ne.s32.totalorder %s64, %s67
      %p73 = scmp.eq.s32.totalorder %s12, 0
      %p74 = por %p72, %p73
      %p75 = scmp.ne.s32.totalorder %s64, %s67
      %p76 = scmp.eq.s32.totalorder %s17, 3
      %p77 = por %p75, %p76
      %p78 = scmp.ne.s32.totalorder %s67, %s68
      %p79 = scmp.eq.s32.totalorder %s17, 0
      %p80 = por %p78, %p79
      %p81 = scmp.ne.s32.totalorder %s67, %s68
      %p82 = scmp.eq.s32.totalorder %s18, 3
      %p83 = por %p81, %p82
      %p85 = scmp.ne.s32.totalorder %s68, %s84
      %p86 = scmp.eq.s32.totalorder %s18, 0
      %p87 = por %p85, %p86
      %s88 = ssub.s32 %s12, %s19
      %p89 = scmp.eq.s32.totalorder %s88, 0
      %s91 = sadd.s32 %s90, 1
      %s92 = scalar_select %p89, %s90, %s91
      %p95 = pneg %p89
      %p96 = scmp.eq.s32.totalorder %s12, 3
      %p97 = por %p95, %p96
      %p98 = scmp.ne.s32.totalorder %s90, %s93
      %p99 = scmp.eq.s32.totalorder %s12, 0
      %p100 = por %p98, %p99
      %p101 = scmp.ne.s32.totalorder %s90, %s93
      %p102 = scmp.eq.s32.totalorder %s17, 3
      %p103 = por %p101, %p102
      %p104 = scmp.ne.s32.totalorder %s93, %s94
      %p105 = scmp.eq.s32.totalorder %s17, 0
      %p106 = por %p104, %p105
      %p107 = scmp.ne.s32.totalorder %s93, %s94
      %p108 = scmp.eq.s32.totalorder %s18, 3
      %p109 = por %p107, %p108
      %p111 = scmp.ne.s32.totalorder %s94, %s110
      %p112 = scmp.eq.s32.totalorder %s18, 0
      %p113 = por %p111, %p112
      %s114 = ssub.s32 %s12, %s19
      %p115 = scmp.eq.s32.totalorder %s114, 0
      %s117 = sadd.s32 %s116, 1
      %s118 = scalar_select %p115, %s116, %s117
      %p121 = pneg %p115
      %p122 = scmp.eq.s32.totalorder %s12, 3
      %p123 = por %p121, %p122
      %p124 = scmp.ne.s32.totalorder %s116, %s119
      %p125 = scmp.eq.s32.totalorder %s12, 0
      %p126 = por %p124, %p125
      %p127 = scmp.ne.s32.totalorder %s116, %s119
      %p128 = scmp.eq.s32.totalorder %s17, 3
      %p129 = por %p127, %p128
      %p130 = scmp.ne.s32.totalorder %s119, %s120
      %p131 = scmp.eq.s32.totalorder %s17, 0
      %p132 = por %p130, %p131
      %p133 = scmp.ne.s32.totalorder %s119, %s120
      %p134 = scmp.eq.s32.totalorder %s18, 3
      %p135 = por %p133, %p134
      %p137 = scmp.ne.s32.totalorder %s120, %s136
      %p138 = scmp.eq.s32.totalorder %s18, 0
      %p139 = por %p137, %p138
      %p140 = scmp.le.s32.totalorder 1, %s12
      %p141 = scmp.lt.s32.totalorder %s12, 5
      %p142 = pnand %p140, %p141
      %p143 = pneg %p142
      // Predicated region
      $region9: #{_linear_3dmm_pallas.1} parent=5 // pred_check
        _
      $region10: #{_linear_3dmm_pallas.1} parent=5 // pred_check_branch
        %145 = sbr.rel (%p142) target = $region12
      $region11: #{_linear_3dmm_pallas.1} parent=5 // pred_region
        %s146 = ssub.s32 %s12, 1
        // Predicated region
        $region13: #{_linear_3dmm_pallas.1} parent=11 // pred_check
          %p147 = pneg %p33
        $region14: #{_linear_3dmm_pallas.1} parent=11 // pred_check_branch
          %149 = sbr.rel (%p147) target = $region16
        $region15: #{_linear_3dmm_pallas.1} parent=11 // pred_region
          %s151 = ssub.s32 32, 32
          %152 = vsyncadd [#allocation3], %s151
          %s154 = sshll.u32 [#allocation2], 4
          %s155 = int_to_ptr.vmem [resolvable:$true] %s154
          %157 = dma.hbm_to_vmem [thread:$0]  %s0, 32, %s155, [#allocation3]
        $region16: #{_linear_3dmm_pallas.1} parent=11 // pred_fallthru
          _
        // Predicated region
        $region17: #{_linear_3dmm_pallas.1} parent=11 // pred_check
          %p158 = pneg %p54
        $region18: #{_linear_3dmm_pallas.1} parent=11 // pred_check_branch
          %160 = sbr.rel (%p158) target = $region20
        $region19: #{_linear_3dmm_pallas.1} parent=11 // pred_region
          %s162 = ssub.s32 16, 16
          %163 = vsyncadd [#allocation5], %s162
          %s165 = sshll.u32 [#allocation4], 4
          %s166 = int_to_ptr.vmem [resolvable:$true] %s165
          %168 = dma.hbm_to_vmem [thread:$0]  %s1, 16, %s166, [#allocation5]
        $region20: #{_linear_3dmm_pallas.1} parent=11 // pred_fallthru
          _
      $region12: #{_linear_3dmm_pallas.1} parent=5 // pred_fallthru
        _
      %p169 = scmp.lt.s32.totalorder %s12, 4
      // Predicated region
      $region21: #{_linear_3dmm_pallas.1} parent=5 // pred_check
        %p170 = pneg %p169
      $region22: #{_linear_3dmm_pallas.1} parent=5 // pred_check_branch
        %172 = sbr.rel (%p170) target = $region24
      $region23: #{_linear_3dmm_pallas.1} parent=5 // pred_region
        // Predicated region
        $region25: #{_linear_3dmm_pallas.1} parent=23 // pred_check
          %p173 = pneg %p74
        $region26: #{_linear_3dmm_pallas.1} parent=23 // pred_check_branch
          %175 = sbr.rel (%p173) target = $region28
        $region27: #{_linear_3dmm_pallas.1} parent=23 // pred_region
          %s176 = sand.u32 %s12, 1
          %s177 = scalar_lea.sflag [#allocation3], %s176
          %s178 = sand.u32 %s64, 1
          %s179 = smul.addr %s178, 56
          %s180 = scalar_lea.vmem [#allocation6], %s179
          %s181 = smul.u32 7, %s12
          %s183 = ssub.s32 896, 896
          %184 = vsyncadd %s177, %s183
          %s185 = smul.addr %s181, 64
          %s186 = scalar_lea.hbm %s2, %s185
          %s187 = sshll.u32 %s180, 4
          %s188 = int_to_ptr.vmem [resolvable:$true] %s187
          %193 = dma.hbm_to_vmem [thread:$0]  %s186, 896, %s188, %s177, 1792, 448, 28
        $region28: #{_linear_3dmm_pallas.1} parent=23 // pred_fallthru
          _
        // Predicated region
        $region29: #{_linear_3dmm_pallas.1} parent=23 // pred_check
          %p194 = pneg %p100
        $region30: #{_linear_3dmm_pallas.1} parent=23 // pred_check_branch
          %196 = sbr.rel (%p194) target = $region32
        $region31: #{_linear_3dmm_pallas.1} parent=23 // pred_region
          %s197 = sand.u32 %s12, 1
          %s198 = scalar_lea.sflag [#allocation3], %s197
          %s199 = sand.u32 %s90, 1
          %s200 = smul.addr %s199, 7
          %s201 = scalar_lea.vmem [#allocation7], %s200
          %s202 = smul.u32 7, %s12
          %s204 = ssub.s32 112, 112
          %205 = vsyncadd %s198, %s204
          %s206 = smul.addr %s202, 16
          %s207 = scalar_lea.hbm %s3, %s206
          %s209 = sshll.u32 %s201, 4
          %s210 = int_to_ptr.vmem [resolvable:$true] %s209
          %212 = dma.hbm_to_vmem [thread:$0]  %s207, 112, %s210, %s198
        $region32: #{_linear_3dmm_pallas.1} parent=23 // pred_fallthru
          _
      $region24: #{_linear_3dmm_pallas.1} parent=5 // pred_fallthru
        _
      %p213 = scmp.le.s32.totalorder 1, %s12
      %p214 = scmp.lt.s32.totalorder %s12, 5
      %p215 = pnand %p213, %p214
      %p216 = pneg %p215
      // Predicated region
      $region33: #{_linear_3dmm_pallas.1} parent=5 // pred_check
        _
      $region34: #{_linear_3dmm_pallas.1} parent=5 // pred_check_branch
        %218 = sbr.rel (%p215) target = $region36
      $region35: #{_linear_3dmm_pallas.1} parent=5 // pred_region
        %s219 = ssub.s32 %s12, 1
        // Predicated region
        $region37: #{_linear_3dmm_pallas.1} parent=35 // pred_check
          %p220 = pneg %p33
        $region38: #{_linear_3dmm_pallas.1} parent=35 // pred_check_branch
          %222 = sbr.rel (%p220) target = $region40
        $region39: #{_linear_3dmm_pallas.1} parent=35 // pred_region
          %223 = dma.done [#allocation3], 32
        $region40: #{_linear_3dmm_pallas.1} parent=35 // pred_fallthru
          _
        // Predicated region
        $region41: #{_linear_3dmm_pallas.1} parent=35 // pred_check
          %p224 = pneg %p54
        $region42: #{_linear_3dmm_pallas.1} parent=35 // pred_check_branch
          %226 = sbr.rel (%p224) target = $region44
        $region43: #{_linear_3dmm_pallas.1} parent=35 // pred_region
          %227 = dma.done [#allocation5], 16
        $region44: #{_linear_3dmm_pallas.1} parent=35 // pred_fallthru
          _
        %s228 = sand.u32 %s17, 1
        %s229 = scalar_lea.sflag [#allocation3], %s228
        %s230 = sand.u32 %s67, 1
        %s231 = smul.addr %s230, 56
        %s232 = scalar_lea.vmem [#allocation6], %s231
        // Predicated region
        $region45: #{_linear_3dmm_pallas.1} parent=35 // pred_check
          %p233 = pneg %p80
        $region46: #{_linear_3dmm_pallas.1} parent=35 // pred_check_branch
          %235 = sbr.rel (%p233) target = $region48
        $region47: #{_linear_3dmm_pallas.1} parent=35 // pred_region
          %236 = dma.done %s229, 896
        $region48: #{_linear_3dmm_pallas.1} parent=35 // pred_fallthru
          _
        %s237 = sand.u32 %s17, 1
        %s238 = scalar_lea.sflag [#allocation3], %s237
        %s239 = sand.u32 %s93, 1
        %s240 = smul.addr %s239, 7
        %s241 = scalar_lea.vmem [#allocation7], %s240
        // Predicated region
        $region49: #{_linear_3dmm_pallas.1} parent=35 // pred_check
          %p242 = pneg %p106
        $region50: #{_linear_3dmm_pallas.1} parent=35 // pred_check_branch
          %244 = sbr.rel (%p242) target = $region52
        $region51: #{_linear_3dmm_pallas.1} parent=35 // pred_region
          %245 = dma.done %s238, 112
        $region52: #{_linear_3dmm_pallas.1} parent=35 // pred_fallthru
          _
        %p246 = pneg %p33
        %p247 = pneg %p30
        %p248 = pneg %p54
        %p249 = pneg %p51
        %s250 = sand.u32 %s17, 1
        %s251 = scalar_lea.sflag [#allocation3], %s250
        %s252 = sand.u32 %s67, 1
        %s253 = smul.addr %s252, 56
        %s254 = scalar_lea.vmem [#allocation6], %s253
        %p255 = pneg %p80
        %p256 = pneg %p77
        %s257 = sand.u32 %s17, 1
        %s258 = scalar_lea.sflag [#allocation3], %s257
        %s259 = sand.u32 %s93, 1
        %s260 = smul.addr %s259, 7
        %s261 = scalar_lea.vmem [#allocation7], %s260
        %p262 = pneg %p106
        %p263 = pneg %p103
        %p264 = pneg %p132
        %p265 = pneg %p129
        %s266 = smul.u32 7, %s17
        %p267 = scmp.lt.s32.totalorder %s266, 27
        %s268 = scalar_select %p267, %s266, 27
        %s269 = smul.addr %s268, 2
        %s270 = scalar_lea.vmem %s4, %s269
        %s271 = smul.u32 7, %s17
        %s272 = smul.u32 7, %s17
        %s273 = smul.u32 7, %s17
        %p274 = scmp.lt.s32.totalorder %s273, 27
        %s275 = scalar_select %p274, %s273, 27
        %s276 = smul.addr %s275, 2
        %s277 = scalar_lea.vmem %s4, %s276
        %s278 = smul.u32 7, %s17
        %v279 = vld [vmem:[#allocation2] sm:$0x3]
        %v280 = vld [vmem:[#allocation4] sm:$0x1]
        %v282 = vlaneseq
        %v283 = vshrl.u32 %v282, 7
        %v284 = vsub.s32 0, %v283
        %v285 = vrot.slane %v280, %v284
        %v287 = vmul.f32 %v279, %v285
        %v288 = vld [vmem:[%s232] sm:$0xff]
        %v289 = vld [vmem:[%s232 + $0x8] sm:$0xff]
        %v290 = vld [vmem:[%s232 + $0x10] sm:$0xff]
        %v291 = vld [vmem:[%s232 + $0x18] sm:$0xf]
        %v292 = vld [vmem:[%s232 + $0x1c] sm:$0xff]
        %v293 = vld [vmem:[%s232 + $0x24] sm:$0xff]
        %v294 = vld [vmem:[%s232 + $0x2c] sm:$0xff]
        %v295 = vld [vmem:[%s232 + $0x34] sm:$0xf]
        %v296 = vunpack.c.l.bf16 %v288
        %v297 = vunpack.c.h.bf16 %v288
        %v298 = vunpack.c.l.bf16 %v289
        %v299 = vunpack.c.h.bf16 %v289
        %v300 = vunpack.c.l.bf16 %v290
        %v301 = vunpack.c.h.bf16 %v290
        %v302 = vunpack.c.l.bf16 %v291
        %v303 = vunpack.c.l.bf16 %v292
        %v304 = vunpack.c.h.bf16 %v292
        %v305 = vunpack.c.l.bf16 %v293
        %v306 = vunpack.c.h.bf16 %v293
        %v307 = vunpack.c.l.bf16 %v294
        %v308 = vunpack.c.h.bf16 %v294
        %v309 = vunpack.c.l.bf16 %v295
        %v310 = vld [vmem:[%s241] sm:$0xff]
        %v312 = vlaneseq
        %v313 = vshrl.u32 %v312, 7
        %v314 = vsub.s32 0, %v313
        %v315 = vrot.slane %v310, %v314
        %v316 = vlaneseq
        %v317 = vshrl.u32 %v316, 7
        %v318 = vsub.s32 1, %v317
        %v319 = vrot.slane %v310, %v318
        %v320 = vlaneseq
        %v321 = vshrl.u32 %v320, 7
        %v322 = vsub.s32 2, %v321
        %v323 = vrot.slane %v310, %v322
        %v324 = vlaneseq
        %v325 = vshrl.u32 %v324, 7
        %v326 = vsub.s32 3, %v325
        %v327 = vrot.slane %v310, %v326
        %v328 = vlaneseq
        %v329 = vshrl.u32 %v328, 7
        %v330 = vsub.s32 4, %v329
        %v331 = vrot.slane %v310, %v330
        %v332 = vlaneseq
        %v333 = vshrl.u32 %v332, 7
        %v334 = vsub.s32 5, %v333
        %v335 = vrot.slane %v310, %v334
        %v336 = vlaneseq
        %v337 = vshrl.u32 %v336, 7
        %v338 = vsub.s32 6, %v337
        %v339 = vrot.slane %v310, %v338
        %vm347 = vcmask 130048
        %v349 = vsel %vm347, %v287, 0
        %351 = vmatprep.subr.mxu0 0.0
        %352 = vmatpush1.msra.mxu0 0.0
        %353 = vmatprep.subr.mxu0 0.0
        %354 = vmatpush1.msra.mxu0 0.0
        %355 = vmatprep.subr.mxu0 0.0
        %356 = vmatpush1.msra.mxu0 0.0
        %357 = vmatprep.subr.mxu0 0.0
        %358 = vmatpush1.msra.mxu0 0.0
        %359 = vmatprep.subr.mxu0 0.0
        %360 = vmatpush1.msra.mxu0 0.0
        %361 = vmatprep.subr.mxu0 0.0
        %362 = vmatpush1.msra.mxu0 0.0
        %363 = vmatprep.subr.mxu0 0.0
        %364 = vmatpush1.msra.mxu0 0.0
        %365 = vmatprep.subr.mxu0 0.0
        %366 = vmatpush1.msra.mxu0 0.0
        %367 = vmatprep.subr.mxu0 0.0
        %368 = vmatpush1.msra.mxu0 0.0
        %369 = vmatprep.subr.mxu0 0.0
        %370 = vmatpush1.msra.mxu0 0.0
        %371 = vmatprep.subr.mxu0 0.0
        %372 = vmatpush1.msra.mxu0 0.0
        %373 = vmatprep.subr.mxu0 0.0
        %374 = vmatpush1.msra.mxu0 0.0
        %375 = vmatprep.subr.mxu0 0.0
        %376 = vmatpush1.msra.mxu0 0.0
        %377 = vmatprep.subr.mxu0 0.0
        %378 = vmatpush1.msra.mxu0 0.0
        %379 = vmatprep.subr.mxu0 %v304
        %380 = vmatpush1.msra.mxu0 %v303
        %381 = vmatprep.subr.mxu0 %v297
        %382 = vmatpush1.msra.mxu0 %v296
        %383 = vmatprep.subr.mxu0 0.0
        %384 = vmatpush2.msra.mxu0 0.0
        %385 = vmatprep.subr.mxu0 0.0
        %386 = vmatpush2.msra.mxu0 0.0
        %387 = vmatprep.subr.mxu0 0.0
        %388 = vmatpush2.msra.mxu0 0.0
        %389 = vmatprep.subr.mxu0 0.0
        %390 = vmatpush2.msra.mxu0 0.0
        %391 = vmatprep.subr.mxu0 0.0
        %392 = vmatpush2.msra.mxu0 0.0
        %393 = vmatprep.subr.mxu0 0.0
        %394 = vmatpush2.msra.mxu0 0.0
        %395 = vmatprep.subr.mxu0 0.0
        %396 = vmatpush2.msra.mxu0 0.0
        %397 = vmatprep.subr.mxu0 0.0
        %398 = vmatpush2.msra.mxu0 0.0
        %399 = vmatprep.subr.mxu0 0.0
        %400 = vmatpush2.msra.mxu0 0.0
        %401 = vmatprep.subr.mxu0 0.0
        %402 = vmatpush2.msra.mxu0 0.0
        %403 = vmatprep.subr.mxu0 0.0
        %404 = vmatpush2.msra.mxu0 0.0
        %405 = vmatprep.subr.mxu0 0.0
        %406 = vmatpush2.msra.mxu0 0.0
        %407 = vmatprep.subr.mxu0 0.0
        %408 = vmatpush2.msra.mxu0 0.0
        %409 = vmatprep.subr.mxu0 0.0
        %410 = vmatpush2.msra.mxu0 0.0
        %411 = vmatprep.subr.mxu0 0.0
        %412 = vmatpush2.msra.mxu0 0.0
        %413 = vmatprep.subr.mxu0 0.0
        %414 = vmatpush2.msra.mxu0 0.0
        %415 = vmatprep.mubr.f32.mxu0 0.0
        %416 = vmatmul.mubr.f32.gmra.mxu0 %v349
        %v417 = vpop.f32.mrf.mxu0
        %v418 = vadd.f32 %v315, %v417
        %v419 = vpop.f32.mrf.mxu0
        %v420 = vadd.f32 %v319, %v419
        %421 = vdwg.mxu0
        %422 = vmatprep.subr.mxu0 0.0
        %423 = vmatpush1.msra.mxu0 0.0
        %424 = vmatprep.subr.mxu0 0.0
        %425 = vmatpush1.msra.mxu0 0.0
        %426 = vmatprep.subr.mxu0 0.0
        %427 = vmatpush1.msra.mxu0 0.0
        %428 = vmatprep.subr.mxu0 0.0
        %429 = vmatpush1.msra.mxu0 0.0
        %430 = vmatprep.subr.mxu0 0.0
        %431 = vmatpush1.msra.mxu0 0.0
        %432 = vmatprep.subr.mxu0 0.0
        %433 = vmatpush1.msra.mxu0 0.0
        %434 = vmatprep.subr.mxu0 0.0
        %435 = vmatpush1.msra.mxu0 0.0
        %436 = vmatprep.subr.mxu0 0.0
        %437 = vmatpush1.msra.mxu0 0.0
        %438 = vmatprep.subr.mxu0 0.0
        %439 = vmatpush1.msra.mxu0 0.0
        %440 = vmatprep.subr.mxu0 0.0
        %441 = vmatpush1.msra.mxu0 0.0
        %442 = vmatprep.subr.mxu0 0.0
        %443 = vmatpush1.msra.mxu0 0.0
        %444 = vmatprep.subr.mxu0 0.0
        %445 = vmatpush1.msra.mxu0 0.0
        %446 = vmatprep.subr.mxu0 0.0
        %447 = vmatpush1.msra.mxu0 0.0
        %448 = vmatprep.subr.mxu0 0.0
        %449 = vmatpush1.msra.mxu0 0.0
        %450 = vmatprep.subr.mxu0 %v306
        %451 = vmatpush1.msra.mxu0 %v305
        %452 = vmatprep.subr.mxu0 %v299
        %453 = vmatpush1.msra.mxu0 %v298
        %454 = vmatprep.subr.mxu0 0.0
        %455 = vmatpush2.msra.mxu0 0.0
        %456 = vmatprep.subr.mxu0 0.0
        %457 = vmatpush2.msra.mxu0 0.0
        %458 = vmatprep.subr.mxu0 0.0
        %459 = vmatpush2.msra.mxu0 0.0
        %460 = vmatprep.subr.mxu0 0.0
        %461 = vmatpush2.msra.mxu0 0.0
        %462 = vmatprep.subr.mxu0 0.0
        %463 = vmatpush2.msra.mxu0 0.0
        %464 = vmatprep.subr.mxu0 0.0
        %465 = vmatpush2.msra.mxu0 0.0
        %466 = vmatprep.subr.mxu0 0.0
        %467 = vmatpush2.msra.mxu0 0.0
        %468 = vmatprep.subr.mxu0 0.0
        %469 = vmatpush2.msra.mxu0 0.0
        %470 = vmatprep.subr.mxu0 0.0
        %471 = vmatpush2.msra.mxu0 0.0
        %472 = vmatprep.subr.mxu0 0.0
        %473 = vmatpush2.msra.mxu0 0.0
        %474 = vmatprep.subr.mxu0 0.0
        %475 = vmatpush2.msra.mxu0 0.0
        %476 = vmatprep.subr.mxu0 0.0
        %477 = vmatpush2.msra.mxu0 0.0
        %478 = vmatprep.subr.mxu0 0.0
        %479 = vmatpush2.msra.mxu0 0.0
        %480 = vmatprep.subr.mxu0 0.0
        %481 = vmatpush2.msra.mxu0 0.0
        %482 = vmatprep.subr.mxu0 0.0
        %483 = vmatpush2.msra.mxu0 0.0
        %484 = vmatprep.subr.mxu0 0.0
        %485 = vmatpush2.msra.mxu0 0.0
        %486 = vmatprep.mubr.f32.mxu0 0.0
        %487 = vmatmul.mubr.f32.gmra.mxu0 %v349
        %v488 = vpop.f32.mrf.mxu0
        %v489 = vadd.f32 %v323, %v488
        %v490 = vpop.f32.mrf.mxu0
        %v491 = vadd.f32 %v327, %v490
        %492 = vdwg.mxu0
        %493 = vmatprep.subr.mxu0 0.0
        %494 = vmatpush1.msra.mxu0 0.0
        %495 = vmatprep.subr.mxu0 0.0
        %496 = vmatpush1.msra.mxu0 0.0
        %497 = vmatprep.subr.mxu0 0.0
        %498 = vmatpush1.msra.mxu0 0.0
        %499 = vmatprep.subr.mxu0 0.0
        %500 = vmatpush1.msra.mxu0 0.0
        %501 = vmatprep.subr.mxu0 0.0
        %502 = vmatpush1.msra.mxu0 0.0
        %503 = vmatprep.subr.mxu0 0.0
        %504 = vmatpush1.msra.mxu0 0.0
        %505 = vmatprep.subr.mxu0 0.0
        %506 = vmatpush1.msra.mxu0 0.0
        %507 = vmatprep.subr.mxu0 0.0
        %508 = vmatpush1.msra.mxu0 0.0
        %509 = vmatprep.subr.mxu0 0.0
        %510 = vmatpush1.msra.mxu0 0.0
        %511 = vmatprep.subr.mxu0 0.0
        %512 = vmatpush1.msra.mxu0 0.0
        %513 = vmatprep.subr.mxu0 0.0
        %514 = vmatpush1.msra.mxu0 0.0
        %515 = vmatprep.subr.mxu0 0.0
        %516 = vmatpush1.msra.mxu0 0.0
        %517 = vmatprep.subr.mxu0 0.0
        %518 = vmatpush1.msra.mxu0 0.0
        %519 = vmatprep.subr.mxu0 0.0
        %520 = vmatpush1.msra.mxu0 0.0
        %521 = vmatprep.subr.mxu0 %v308
        %522 = vmatpush1.msra.mxu0 %v307
        %523 = vmatprep.subr.mxu0 %v301
        %524 = vmatpush1.msra.mxu0 %v300
        %525 = vmatprep.subr.mxu0 0.0
        %526 = vmatpush2.msra.mxu0 0.0
        %527 = vmatprep.subr.mxu0 0.0
        %528 = vmatpush2.msra.mxu0 0.0
        %529 = vmatprep.subr.mxu0 0.0
        %530 = vmatpush2.msra.mxu0 0.0
        %531 = vmatprep.subr.mxu0 0.0
        %532 = vmatpush2.msra.mxu0 0.0
        %533 = vmatprep.subr.mxu0 0.0
        %534 = vmatpush2.msra.mxu0 0.0
        %535 = vmatprep.subr.mxu0 0.0
        %536 = vmatpush2.msra.mxu0 0.0
        %537 = vmatprep.subr.mxu0 0.0
        %538 = vmatpush2.msra.mxu0 0.0
        %539 = vmatprep.subr.mxu0 0.0
        %540 = vmatpush2.msra.mxu0 0.0
        %541 = vmatprep.subr.mxu0 0.0
        %542 = vmatpush2.msra.mxu0 0.0
        %543 = vmatprep.subr.mxu0 0.0
        %544 = vmatpush2.msra.mxu0 0.0
        %545 = vmatprep.subr.mxu0 0.0
        %546 = vmatpush2.msra.mxu0 0.0
        %547 = vmatprep.subr.mxu0 0.0
        %548 = vmatpush2.msra.mxu0 0.0
        %549 = vmatprep.subr.mxu0 0.0
        %550 = vmatpush2.msra.mxu0 0.0
        %551 = vmatprep.subr.mxu0 0.0
        %552 = vmatpush2.msra.mxu0 0.0
        %553 = vmatprep.subr.mxu0 0.0
        %554 = vmatpush2.msra.mxu0 0.0
        %555 = vmatprep.subr.mxu0 0.0
        %556 = vmatpush2.msra.mxu0 0.0
        %557 = vmatprep.mubr.f32.mxu0 0.0
        %558 = vmatmul.mubr.f32.gmra.mxu0 %v349
        %v559 = vpop.f32.mrf.mxu0
        %v560 = vadd.f32 %v331, %v559
        %v561 = vpop.f32.mrf.mxu0
        %v562 = vadd.f32 %v335, %v561
        %563 = vdwg.mxu0
        %564 = vmatprep.subr.mxu0 0.0
        %565 = vmatpush1.msra.mxu0 0.0
        %566 = vmatprep.subr.mxu0 0.0
        %567 = vmatpush1.msra.mxu0 0.0
        %568 = vmatprep.subr.mxu0 0.0
        %569 = vmatpush1.msra.mxu0 0.0
        %570 = vmatprep.subr.mxu0 0.0
        %571 = vmatpush1.msra.mxu0 0.0
        %572 = vmatprep.subr.mxu0 0.0
        %573 = vmatpush1.msra.mxu0 0.0
        %574 = vmatprep.subr.mxu0 0.0
        %575 = vmatpush1.msra.mxu0 0.0
        %576 = vmatprep.subr.mxu0 0.0
        %577 = vmatpush1.msra.mxu0 0.0
        %578 = vmatprep.subr.mxu0 0.0
        %579 = vmatpush1.msra.mxu0 0.0
        %580 = vmatprep.subr.mxu0 0.0
        %581 = vmatpush1.msra.mxu0 0.0
        %582 = vmatprep.subr.mxu0 0.0
        %583 = vmatpush1.msra.mxu0 0.0
        %584 = vmatprep.subr.mxu0 0.0
        %585 = vmatpush1.msra.mxu0 0.0
        %586 = vmatprep.subr.mxu0 0.0
        %587 = vmatpush1.msra.mxu0 0.0
        %588 = vmatprep.subr.mxu0 0.0
        %589 = vmatpush1.msra.mxu0 0.0
        %590 = vmatprep.subr.mxu0 0.0
        %591 = vmatpush1.msra.mxu0 0.0
        %592 = vmatprep.subr.mxu0 0.0
        %593 = vmatpush1.msra.mxu0 %v309
        %594 = vmatprep.subr.mxu0 0.0
        %595 = vmatpush1.msra.mxu0 %v302
        %596 = vmatprep.subr.mxu0 0.0
        %597 = vmatpush2.msra.mxu0 0.0
        %598 = vmatprep.subr.mxu0 0.0
        %599 = vmatpush2.msra.mxu0 0.0
        %600 = vmatprep.subr.mxu0 0.0
        %601 = vmatpush2.msra.mxu0 0.0
        %602 = vmatprep.subr.mxu0 0.0
        %603 = vmatpush2.msra.mxu0 0.0
        %604 = vmatprep.subr.mxu0 0.0
        %605 = vmatpush2.msra.mxu0 0.0
        %606 = vmatprep.subr.mxu0 0.0
        %607 = vmatpush2.msra.mxu0 0.0
        %608 = vmatprep.subr.mxu0 0.0
        %609 = vmatpush2.msra.mxu0 0.0
        %610 = vmatprep.subr.mxu0 0.0
        %611 = vmatpush2.msra.mxu0 0.0
        %612 = vmatprep.subr.mxu0 0.0
        %613 = vmatpush2.msra.mxu0 0.0
        %614 = vmatprep.subr.mxu0 0.0
        %615 = vmatpush2.msra.mxu0 0.0
        %616 = vmatprep.subr.mxu0 0.0
        %617 = vmatpush2.msra.mxu0 0.0
        %618 = vmatprep.subr.mxu0 0.0
        %619 = vmatpush2.msra.mxu0 0.0
        %620 = vmatprep.subr.mxu0 0.0
        %621 = vmatpush2.msra.mxu0 0.0
        %622 = vmatprep.subr.mxu0 0.0
        %623 = vmatpush2.msra.mxu0 0.0
        %624 = vmatprep.subr.mxu0 0.0
        %625 = vmatpush2.msra.mxu0 0.0
        %626 = vmatprep.subr.mxu0 0.0
        %627 = vmatpush2.msra.mxu0 0.0
        %628 = vmatprep.mubr.f32.mxu0 0.0
        %629 = vmatmul.mubr.f32.gmra.mxu0 %v349
        %v630 = vpop.f32.mrf.mxu0
        %v631 = vadd.f32 %v339, %v630
        %v632 = vpop.f32.mrf.mxu0
        %633 = vdwg.mxu0
        %v641 = vcombine.low %v418, %v420
        %v642 = vcombine.low %v489, %v491
        %v644 = vunpack.c.l.s4 1983009808
        %v645 = vunpack.c.0.s8 %v644
        %v646 = vlaneseq
        %v647 = vshrl.u32 %v646, 7
        %v648 = vsub.s32 %v645, %v647
        %v649 = vrot.slane %v641, %v648
        %v651 = vunpack.c.l.s4 1983009808
        %v652 = vunpack.c.0.s8 %v651
        %v653 = vlaneseq
        %v654 = vshrl.u32 %v653, 7
        %v655 = vsub.s32 %v652, %v654
        %v656 = vrot.slane %v642, %v655
        %v657 = vcombine.low %v649, %v656
        %v658 = vcombine.low %v560, %v562
        %v660 = vunpack.c.l.s4 1983009808
        %v661 = vunpack.c.0.s8 %v660
        %v662 = vlaneseq
        %v663 = vshrl.u32 %v662, 7
        %v664 = vsub.s32 %v661, %v663
        %v665 = vrot.slane %v658, %v664
        %v667 = vunpack.c.l.s4 1983009808
        %v668 = vunpack.c.0.s8 %v667
        %v669 = vlaneseq
        %v670 = vshrl.u32 %v669, 7
        %v671 = vsub.s32 %v668, %v670
        %v672 = vrot.slane %v631, %v671
        %v673 = vcombine.low %v665, %v672
        %676 = vst [vmem:[%s277] sm:$0xff] %v657
        %677 = vst [vmem:[%s277 + $0x8] sm:$0x3f] %v673
        %s678 = smul.u32 7, %s17
        %p679 = scmp.lt.s32.totalorder %s678, 27
        %s680 = scalar_select %p679, %s678, 27
        %s681 = smul.addr %s680, 2
        %s682 = scalar_lea.vmem %s4, %s681
        // Predicated region
        $region53: #{_linear_3dmm_pallas.1} parent=35 // pred_check
          %p683 = pneg %p129
        $region54: #{_linear_3dmm_pallas.1} parent=35 // pred_check_branch
          %685 = sbr.rel (%p683) target = $region56
        $region55: #{_linear_3dmm_pallas.1} parent=35 // pred_region
          %s686 = smul.u32 7, %s17
        $region56: #{_linear_3dmm_pallas.1} parent=35 // pred_fallthru
          _
      $region36: #{_linear_3dmm_pallas.1} parent=5 // pred_fallthru
        _
      %p687 = scmp.le.s32.totalorder 2, %s12
      // Predicated region
      $region57: #{_linear_3dmm_pallas.1} parent=5 // pred_check
        %p688 = pneg %p687
      $region58: #{_linear_3dmm_pallas.1} parent=5 // pred_check_branch
        %690 = sbr.rel (%p688) target = $region60
      $region59: #{_linear_3dmm_pallas.1} parent=5 // pred_region
        %s691 = ssub.s32 %s12, 2
        // Predicated region
        $region61: #{_linear_3dmm_pallas.1} parent=59 // pred_check
          %p692 = pneg %p135
        $region62: #{_linear_3dmm_pallas.1} parent=59 // pred_check_branch
          %694 = sbr.rel (%p692) target = $region64
        $region63: #{_linear_3dmm_pallas.1} parent=59 // pred_region
          %s695 = smul.u32 7, %s18
          %p696 = scmp.lt.s32.totalorder %s695, 27
          %s697 = scalar_select %p696, %s695, 27
          %s698 = smul.addr %s697, 2
          %s699 = scalar_lea.vmem %s4, %s698
        $region64: #{_linear_3dmm_pallas.1} parent=59 // pred_fallthru
          _
      $region60: #{_linear_3dmm_pallas.1} parent=5 // pred_fallthru
        _
    $region6: #{_linear_3dmm_pallas.1} parent=1 // loop_footer
      %s16 = sadd.s32 1, %s12
    $region7: #{_linear_3dmm_pallas.1} parent=1 // loop_footer_branch
      %11 = sbr.rel target = $region3
    $region8: #{_linear_3dmm_pallas.1} parent=1 // loop_exit
      _
    %700 = vsyncpa [#allocation3], 1
    %s701 = scalar_lea.sflag [#allocation3], 1
    %702 = vsyncpa %s701, 1
    %703 = vsyncpa [#allocation5], 1

</llo_original>
